<compile_context>
chip_gen: v7x
topology: tpu7x:2x2x1
jax: 0.10.0
libtpu: 0.0.40
codegen_flags: <defaults>
</compile_context>

<pallas_src>
import jax
import jax.numpy as jnp
from jax.experimental import pallas as pl
from jax.experimental.pallas import tpu as pltpu

MARGIN = 1.0        # settings.MARGIN (deterministic in-script choice)
LOSS_EPS = 1e-9     # self.eps in the module
PD_EPS = 1e-6       # F.pairwise_distance default eps (added to the difference)

_NUM_PIPELINE_BUFFERS = 2   # BlockSpec default double-buffering


def _sublane_multiple(dtype):
    """Packed-sublane multiple: 8 for f32, 16 for bf16/f16, 32 for int8/fp8."""
    return max(8, 32 // jnp.dtype(dtype).itemsize)


def _vmem_budgets():
    """(double-buffered data budget, vmem_limit_bytes) for this TPU generation."""
    try:
        cap = int(pltpu.get_tpu_info().vmem_capacity_bytes)
    except Exception:
        cap = 64 * 1024 * 1024              # conservative: assume v7x (64 MiB / TC)
    data_budget = min(int(cap * 0.6), 80 * 1024 * 1024)   # ~38 MiB v7x, ~77 MiB v5e/v6e
    vmem_limit = min(int(cap * 0.75), 100 * 1024 * 1024)  # ~48 MiB v7x, ~96 MiB v5e/v6e
    return data_budget, vmem_limit


def _choose_tile_b(batch, dim, in_dtypes, data_budget):
    """Largest sublane-aligned batch tile whose pipelined footprint fits the budget."""
    sub = max(_sublane_multiple(dt) for dt in in_dtypes)
    if batch <= sub:
        return batch                                   # single block; dims == full array dims
    padded_d = pl.cdiv(dim, 128) * 128                 # lane padding of the VMEM slab
    per_row = sum(padded_d * jnp.dtype(dt).itemsize for dt in in_dtypes)  # both inputs
    per_row += 128 * 4                                 # (tb,1) f32 target pads to (tb,128)
    per_row *= _NUM_PIPELINE_BUFFERS
    tb = data_budget // per_row
    tb = max(sub, min(tb, batch))
    return (tb // sub) * sub


def _make_kernel(tile_b, has_tail, tail_rows):
    """Build the gridded kernel; all arguments are trace-time constants."""

    def partial_sum(losses):
        # (1,1) keepdims-sum reshaped to the (1,1,1) output block.
        return jnp.sum(losses, keepdims=True).reshape(1, 1, 1)

    def kernel(o1_ref, o2_ref, t_ref, out_ref):
        # Native-dtype DMA; upcast to f32 in-register for the math.
        o1 = o1_ref[...].astype(jnp.float32)
        o2 = o2_ref[...].astype(jnp.float32)
        diff = o1 - o2 + PD_EPS                                 # pairwise_distance eps
        dist2 = jnp.sum(diff * diff, axis=-1, keepdims=True)    # (TB, 1) squared L2

        t = t_ref[...]                                          # (TB, 1) f32
        hinge = jnp.maximum(MARGIN - jnp.sqrt(dist2 + LOSS_EPS), 0.0)
        losses = 0.5 * (t * dist2 + (1.0 - t) * hinge * hinge)  # (TB, 1)

        if has_tail:
            is_last = pl.program_id(0) == pl.num_programs(0) - 1

            @pl.when(jnp.logical_not(is_last))
            def _full_tile():
                out_ref[...] = partial_sum(losses)

            @pl.when(is_last)
            def _tail_tile():
                # Rows past the true batch size hold undefined data (the last
                # block reads past the array end); the select masks them out
                # before the reduction, so NaN/Inf cannot propagate.
                row = jax.lax.broadcasted_iota(jnp.int32, (tile_b, 1), 0)
                masked = jnp.where(row < tail_rows, losses, 0.0)
                out_ref[...] = partial_sum(masked)
        else:
            out_ref[...] = partial_sum(losses)

    return kernel


def contrastive_loss(output1, output2, target, size_average=True):
    """output1, output2: (B, D) float32/bfloat16; target: (B,) of {0, 1}."""
    B, D = output1.shape
    data_budget, vmem_limit = _vmem_budgets()
    tb = _choose_tile_b(B, D, (output1.dtype, output2.dtype), data_budget)
    num_tiles = pl.cdiv(B, tb)
    has_tail = (B % tb) != 0
    tail_rows = B - (num_tiles - 1) * tb

    # Target is tiny: cast/reshape in the wrapper so the kernel sees (TB, 1) f32.
    t = target.astype(jnp.float32).reshape(B, 1)

    partials = pl.pallas_call(
        _make_kernel(tb, has_tail, tail_rows),
        out_shape=jax.ShapeDtypeStruct((num_tiles, 1, 1), jnp.float32),
        grid=(num_tiles,),
        in_specs=[
            pl.BlockSpec((tb, D), lambda i: (i, 0)),
            pl.BlockSpec((tb, D), lambda i: (i, 0)),
            pl.BlockSpec((tb, 1), lambda i: (i, 0)),
        ],
        # One partial sum per tile -> no cross-iteration dependence -> the grid
        # axis can be "parallel" (both TensorCores on v7x share the stream).
        out_specs=pl.BlockSpec((1, 1, 1), lambda i: (i, 0, 0)),
        compiler_params=pltpu.CompilerParams(
            dimension_semantics=("parallel",),
            vmem_limit_bytes=vmem_limit,
        ),
    )(output1, output2, t)

    total = jnp.sum(partials)                 # tiny (num_tiles,) reduce in XLA
    return total / B if size_average else total


def _reference(output1, output2, target, size_average=True):
    diff = output1.astype(jnp.float32) - output2.astype(jnp.float32) + PD_EPS
    dist2 = jnp.sum(diff * diff, axis=-1)
    t = target.astype(jnp.float32)
    hinge = jnp.maximum(MARGIN - jnp.sqrt(dist2 + LOSS_EPS), 0.0)
    losses = 0.5 * (t * dist2 + (1.0 - t) * hinge * hinge)
    return losses.mean() if size_average else losses.sum()


if __name__ == "__main__":
    key = jax.random.PRNGKey(0)
    k1, k2, k3, k4, k5, k6 = jax.random.split(key, 6)

    # --- f32 case: B=10 is NOT a multiple of the 8-row f32 tile, exercising the
    # tail-masking path (grid of 2 tiles, last tile partially valid).
    B, D = 10, 32
    o1 = jax.random.normal(k1, (B, D), dtype=jnp.float32)
    o2 = jax.random.normal(k2, (B, D), dtype=jnp.float32)
    tgt = jax.random.bernoulli(k3, 0.5, (B,)).astype(jnp.int32)

    loss_mean = jax.block_until_ready(contrastive_loss(o1, o2, tgt, size_average=True))
    loss_sum = jax.block_until_ready(contrastive_loss(o1, o2, tgt, size_average=False))
    ref_mean = _reference(o1, o2, tgt, size_average=True)
    ref_sum = _reference(o1, o2, tgt, size_average=False)
    assert jnp.allclose(loss_mean, ref_mean, rtol=1e-5, atol=1e-6), (loss_mean, ref_mean)
    assert jnp.allclose(loss_sum, ref_sum, rtol=1e-5, atol=1e-6), (loss_sum, ref_sum)

    # --- bf16 case: exercises the 16-row packed-sublane tile rounding plus a
    # bf16 tail tile (B=40 -> tb=32, tail of 8 rows).
    Bb, Db = 40, 32
    o1b = jax.random.normal(k4, (Bb, Db), dtype=jnp.bfloat16)
    o2b = jax.random.normal(k5, (Bb, Db), dtype=jnp.bfloat16)
    tgtb = jax.random.bernoulli(k6, 0.5, (Bb,)).astype(jnp.int32)

    loss_b = jax.block_until_ready(contrastive_loss(o1b, o2b, tgtb, size_average=True))
    ref_b = _reference(o1b, o2b, tgtb, size_average=True)
    assert jnp.allclose(loss_b, ref_b, rtol=1e-4, atol=1e-5), (loss_b, ref_b)

    print("KERNEL_OK")
</pallas_src>

<mosaic_0001>
module attributes {stable_mosaic.version = 11 : i64} {
  func.func @kernel(%arg0: i32, %arg1: memref<8x32xf32, #tpu.memory_space<vmem>>, %arg2: memref<8x32xf32, #tpu.memory_space<vmem>>, %arg3: memref<8x1xf32, #tpu.memory_space<vmem>>, %arg4: memref<1x1x1xf32, #tpu.memory_space<vmem>>) attributes {dimension_semantics = [#tpu.dimension_semantics<parallel>], iteration_bounds = array<i64: 2>, scalar_prefetch = 0 : i64, scratch_operands = 0 : i64, tpu.core_type = #tpu.core_type<tc>, window_params = [{transform_indices = @transform_0, window_bounds = array<i64: 8, 32>}, {transform_indices = @transform_1, window_bounds = array<i64: 8, 32>}, {transform_indices = @transform_2, window_bounds = array<i64: 8, 1>}, {transform_indices = @transform_3, window_bounds = array<i64: 1, 1, 1>}]} {
    %c0 = arith.constant 0 : index
    %c0_0 = arith.constant 0 : index
    %0 = vector.load %arg1[%c0, %c0_0] : memref<8x32xf32, #tpu.memory_space<vmem>>, vector<8x32xf32>
    %c0_1 = arith.constant 0 : index
    %c0_2 = arith.constant 0 : index
    %1 = vector.load %arg2[%c0_1, %c0_2] : memref<8x32xf32, #tpu.memory_space<vmem>>, vector<8x32xf32>
    %2 = arith.subf %0, %1 : vector<8x32xf32>
    %cst = arith.constant 9.99999997E-7 : f32
    %3 = vector.broadcast %cst : f32 to vector<8x32xf32>
    %4 = arith.addf %2, %3 : vector<8x32xf32>
    %5 = arith.mulf %4, %4 : vector<8x32xf32>
    %cst_3 = arith.constant dense<0.000000e+00> : vector<8xf32>
    %6 = vector.multi_reduction <add>, %5, %cst_3 [1] : vector<8x32xf32> to vector<8xf32>
    %7 = vector.shape_cast %6 : vector<8xf32> to vector<8x1xf32>
    %c0_4 = arith.constant 0 : index
    %c0_5 = arith.constant 0 : index
    %8 = vector.load %arg3[%c0_4, %c0_5] : memref<8x1xf32, #tpu.memory_space<vmem>>, vector<8x1xf32>
    %cst_6 = arith.constant 9.99999971E-10 : f32
    %9 = vector.broadcast %cst_6 : f32 to vector<8x1xf32>
    %10 = arith.addf %7, %9 : vector<8x1xf32>
    %11 = math.sqrt %10 : vector<8x1xf32>
    %cst_7 = arith.constant 1.000000e+00 : f32
    %12 = vector.broadcast %cst_7 : f32 to vector<8x1xf32>
    %13 = arith.subf %12, %11 : vector<8x1xf32>
    %cst_8 = arith.constant 0.000000e+00 : f32
    %14 = vector.broadcast %cst_8 : f32 to vector<8x1xf32>
    %15 = arith.maximumf %13, %14 : vector<8x1xf32>
    %16 = arith.mulf %8, %7 : vector<8x1xf32>
    %cst_9 = arith.constant 1.000000e+00 : f32
    %17 = vector.broadcast %cst_9 : f32 to vector<8x1xf32>
    %18 = arith.subf %17, %8 : vector<8x1xf32>
    %19 = arith.mulf %18, %15 : vector<8x1xf32>
    %20 = arith.mulf %19, %15 : vector<8x1xf32>
    %21 = arith.addf %16, %20 : vector<8x1xf32>
    %cst_10 = arith.constant 5.000000e-01 : f32
    %22 = vector.broadcast %cst_10 : f32 to vector<8x1xf32>
    %23 = arith.mulf %22, %21 : vector<8x1xf32>
    %c1_i32 = arith.constant 1 : i32
    %24 = arith.cmpi eq, %arg0, %c1_i32 : i32
    %true = arith.constant true
    %25 = arith.xori %24, %true : i1
    %26 = arith.extui %25 : i1 to i32
    %c0_i32 = arith.constant 0 : i32
    %27 = arith.cmpi ne, %26, %c0_i32 : i32
    scf.if %27 {
      %30 = vector.shape_cast %23 : vector<8x1xf32> to vector<1x8x1xf32>
      %cst_12 = arith.constant dense<0.000000e+00> : vector<1xf32>
      %31 = vector.multi_reduction <add>, %30, %cst_12 [1, 2] : vector<1x8x1xf32> to vector<1xf32>
      %32 = vector.shape_cast %31 : vector<1xf32> to vector<1x1x1xf32>
      %33 = vector.extract %32[0, 0, 0] : f32 from vector<1x1x1xf32>
      %34 = vector.broadcast %33 : f32 to vector<1x1xf32>
      %35 = vector.shape_cast %34 : vector<1x1xf32> to vector<1x1x1xf32>
      %c0_13 = arith.constant 0 : index
      %c0_14 = arith.constant 0 : index
      %c0_15 = arith.constant 0 : index
      %36 = vector.load %arg4[%c0_13, %c0_14, %c0_15] : memref<1x1x1xf32, #tpu.memory_space<vmem>>, vector<1x1x1xf32>
      tpu.vector_store %arg4[%c0_13, %c0_14, %c0_15], %35 {strides = array<i32>} : memref<1x1x1xf32, #tpu.memory_space<vmem>>, vector<1x1x1xf32>,
    } else {
    }
    %28 = arith.extui %24 : i1 to i32
    %c0_i32_11 = arith.constant 0 : i32
    %29 = arith.cmpi ne, %28, %c0_i32_11 : i32
    scf.if %29 {
      %30 = tpu.iota {dimensions = array<i32: 0>} : vector<8x1xi32>
      %c2_i32 = arith.constant 2 : i32
      %31 = vector.broadcast %c2_i32 : i32 to vector<8x1xi32>
      %32 = arith.cmpi slt, %30, %31 : vector<8x1xi32>
      %cst_12 = arith.constant 0.000000e+00 : f32
      %33 = vector.broadcast %cst_12 : f32 to vector<8x1xf32>
      %34 = arith.select %32, %23, %33 : vector<8x1xi1>, vector<8x1xf32>
      %35 = vector.shape_cast %34 : vector<8x1xf32> to vector<1x8x1xf32>
      %cst_13 = arith.constant dense<0.000000e+00> : vector<1xf32>
      %36 = vector.multi_reduction <add>, %35, %cst_13 [1, 2] : vector<1x8x1xf32> to vector<1xf32>
      %37 = vector.shape_cast %36 : vector<1xf32> to vector<1x1x1xf32>
      %38 = vector.extract %37[0, 0, 0] : f32 from vector<1x1x1xf32>
      %39 = vector.broadcast %38 : f32 to vector<1x1xf32>
      %40 = vector.shape_cast %39 : vector<1x1xf32> to vector<1x1x1xf32>
      %c0_14 = arith.constant 0 : index
      %c0_15 = arith.constant 0 : index
      %c0_16 = arith.constant 0 : index
      %41 = vector.load %arg4[%c0_14, %c0_15, %c0_16] : memref<1x1x1xf32, #tpu.memory_space<vmem>>, vector<1x1x1xf32>
      tpu.vector_store %arg4[%c0_14, %c0_15, %c0_16], %40 {strides = array<i32>} : memref<1x1x1xf32, #tpu.memory_space<vmem>>, vector<1x1x1xf32>,
    } else {
    }
    return
  }
  func.func @transform_0(%arg0: i32) -> (i32, i32) {
    %c0_i32 = arith.constant 0 : i32
    %c0_i32_0 = arith.constant 0 : i32
    return %arg0, %c0_i32 : i32, i32
  }
  func.func @transform_1(%arg0: i32) -> (i32, i32) {
    %c0_i32 = arith.constant 0 : i32
    %c0_i32_0 = arith.constant 0 : i32
    return %arg0, %c0_i32 : i32, i32
  }
  func.func @transform_2(%arg0: i32) -> (i32, i32) {
    %c0_i32 = arith.constant 0 : i32
    %c0_i32_0 = arith.constant 0 : i32
    return %arg0, %c0_i32 : i32, i32
  }
  func.func @transform_3(%arg0: i32) -> (i32, i32, i32) {
    %c0_i32 = arith.constant 0 : i32
    %c0_i32_0 = arith.constant 0 : i32
    %c0_i32_1 = arith.constant 0 : i32
    return %arg0, %c0_i32, %c0_i32_0 : i32, i32, i32
  }
}

</mosaic_0001>

<llo_original>
// kernel: tpu_custom_call.1
$region0: #{tpu_custom_call.1}
  #allocation0 [shape = 'u32[]', space=smem, size = 0x4, offset = 0x4, fixed_abs, tag = 'smem constant byte address 0x4 - core index']
  #allocation1 [shape = 'u32[144,128]{1,0:T(1,128)}', space=vmem, size = 0x12000, scoped, tag = 'internal scratch']
  %s0 = inlined_call_operand.vmem [shape: f32[10,32], index: 0, kind: input, shape index: {}]
  %s1 = inlined_call_operand.hbm [shape: f32[10,32], index: 1, kind: input, shape index: {}]
  %s2 = inlined_call_operand.vmem [shape: f32[10,1], index: 2, kind: input, shape index: {}]
  %s3 = inlined_call_operand.vmem [shape: f32[2,1,1], index: 3, kind: output, shape index: {}]
  %s4 = sld [smem:[#allocation0]]
  $region57: #{tpu_custom_call.1} parent=0
    _
  %s6 = ssub.s32 1, %s4
  %s7 = scalar_select 0, %s6, %s4
  $region1: #{tpu_custom_call.1} parent=0
    #allocation2 [shape = 'u8[8192]{0}', space=vmem, size = 0x2000, scoped, tag = 'input window, operand 1']
    #allocation3 [shape = 's32[2]{0}', space=sflag, size = 0x8, scoped, tag = 'scoped memory for tpu_custom_call.1']
    %8 = vsyncpa [#allocation3], 0
    %s9 = scalar_lea.sflag [#allocation3], 1
    %10 = vsyncpa %s9, 0
    loop: start=0, step=1, limit=4
    $region2: #{tpu_custom_call.1} parent=1 // loop_pre_header
      _
    $region3: #{tpu_custom_call.1} parent=1 // loop_header
      %s12 = sphi 0, %s16
      %p13 = scmp.ge.s32.totalorder %s12, 4
      %s22 = sphi 0, %s24
      %s25 = sphi 0, %s22
      %s26 = sphi 0, %s25
      %s42 = sphi 0, %s26
      %s48 = sphi 0, %s50
      %s51 = sphi 0, %s48
      %s52 = sphi 0, %s51
      %s68 = sphi 0, %s52
      %s74 = sphi 0, %s76
      %s77 = sphi 0, %s74
      %s78 = sphi 0, %s77
      %s94 = sphi 0, %s78
      %s100 = sphi 0, %s102
      %s103 = sphi 0, %s100
      %s104 = sphi 0, %s103
      %s120 = sphi 0, %s104
    $region4: #{tpu_custom_call.1} parent=1 // loop_header_branch
      %15 = sbr.rel (%p13) target = $region8
    $region5: #{tpu_custom_call.1} parent=1 // loop_body
      %s17 = ssub.s32 %s12, 1
      %s18 = ssub.s32 %s12, 2
      %s19 = sadd.s32 %s12, 1
      %s20 = ssub.s32 %s12, %s19
      %p21 = scmp.eq.s32.totalorder %s20, 0
      %s23 = sadd.s32 %s22, 1
      %s24 = scalar_select %p21, %s22, %s23
      %p27 = pneg %p21
      %p28 = scmp.eq.s32.totalorder %s12, 1
      %p29 = por %p27, %p28
      %p30 = scmp.ne.s32.totalorder %s22, %s25
      %p31 = scmp.eq.s32.totalorder %s12, 0
      %p32 = por %p30, %p31
      %p33 = scmp.ne.s32.totalorder %s22, %s25
      %p34 = scmp.eq.s32.totalorder %s17, 1
      %p35 = por %p33, %p34
      %p36 = scmp.ne.s32.totalorder %s25, %s26
      %p37 = scmp.eq.s32.totalorder %s17, 0
      %p38 = por %p36, %p37
      %p39 = scmp.ne.s32.totalorder %s25, %s26
      %p40 = scmp.eq.s32.totalorder %s18, 1
      %p41 = por %p39, %p40
      %p43 = scmp.ne.s32.totalorder %s26, %s42
      %p44 = scmp.eq.s32.totalorder %s18, 0
      %p45 = por %p43, %p44
      %s46 = ssub.s32 %s12, %s19
      %p47 = scmp.eq.s32.totalorder %s46, 0
      %s49 = sadd.s32 %s48, 1
      %s50 = scalar_select %p47, %s48, %s49
      %p53 = pneg %p47
      %p54 = scmp.eq.s32.totalorder %s12, 1
      %p55 = por %p53, %p54
      %p56 = scmp.ne.s32.totalorder %s48, %s51
      %p57 = scmp.eq.s32.totalorder %s12, 0
      %p58 = por %p56, %p57
      %p59 = scmp.ne.s32.totalorder %s48, %s51
      %p60 = scmp.eq.s32.totalorder %s17, 1
      %p61 = por %p59, %p60
      %p62 = scmp.ne.s32.totalorder %s51, %s52
      %p63 = scmp.eq.s32.totalorder %s17, 0
      %p64 = por %p62, %p63
      %p65 = scmp.ne.s32.totalorder %s51, %s52
      %p66 = scmp.eq.s32.totalorder %s18, 1
      %p67 = por %p65, %p66
      %p69 = scmp.ne.s32.totalorder %s52, %s68
      %p70 = scmp.eq.s32.totalorder %s18, 0
      %p71 = por %p69, %p70
      %s72 = ssub.s32 %s12, %s19
      %p73 = scmp.eq.s32.totalorder %s72, 0
      %s75 = sadd.s32 %s74, 1
      %s76 = scalar_select %p73, %s74, %s75
      %p79 = pneg %p73
      %p80 = scmp.eq.s32.totalorder %s12, 1
      %p81 = por %p79, %p80
      %p82 = scmp.ne.s32.totalorder %s74, %s77
      %p83 = scmp.eq.s32.totalorder %s12, 0
      %p84 = por %p82, %p83
      %p85 = scmp.ne.s32.totalorder %s74, %s77
      %p86 = scmp.eq.s32.totalorder %s17, 1
      %p87 = por %p85, %p86
      %p88 = scmp.ne.s32.totalorder %s77, %s78
      %p89 = scmp.eq.s32.totalorder %s17, 0
      %p90 = por %p88, %p89
      %p91 = scmp.ne.s32.totalorder %s77, %s78
      %p92 = scmp.eq.s32.totalorder %s18, 1
      %p93 = por %p91, %p92
      %p95 = scmp.ne.s32.totalorder %s78, %s94
      %p96 = scmp.eq.s32.totalorder %s18, 0
      %p97 = por %p95, %p96
      %s98 = ssub.s32 %s12, %s19
      %p99 = scmp.eq.s32.totalorder %s98, 0
      %s101 = sadd.s32 %s100, 1
      %s102 = scalar_select %p99, %s100, %s101
      %p105 = pneg %p99
      %p106 = scmp.eq.s32.totalorder %s12, 1
      %p107 = por %p105, %p106
      %p108 = scmp.ne.s32.totalorder %s100, %s103
      %p109 = scmp.eq.s32.totalorder %s12, 0
      %p110 = por %p108, %p109
      %p111 = scmp.ne.s32.totalorder %s100, %s103
      %p112 = scmp.eq.s32.totalorder %s17, 1
      %p113 = por %p111, %p112
      %p114 = scmp.ne.s32.totalorder %s103, %s104
      %p115 = scmp.eq.s32.totalorder %s17, 0
      %p116 = por %p114, %p115
      %p117 = scmp.ne.s32.totalorder %s103, %s104
      %p118 = scmp.eq.s32.totalorder %s18, 1
      %p119 = por %p117, %p118
      %p121 = scmp.ne.s32.totalorder %s104, %s120
      %p122 = scmp.eq.s32.totalorder %s18, 0
      %p123 = por %p121, %p122
      %p124 = scmp.le.s32.totalorder 1, %s12
      %p125 = scmp.lt.s32.totalorder %s12, 3
      %p126 = pnand %p124, %p125
      %p127 = pneg %p126
      // Predicated region
      $region9: #{tpu_custom_call.1} parent=5 // pred_check
        _
      $region10: #{tpu_custom_call.1} parent=5 // pred_check_branch
        %129 = sbr.rel (%p126) target = $region12
      $region11: #{tpu_custom_call.1} parent=5 // pred_region
        %s130 = ssub.s32 %s12, 1
      $region12: #{tpu_custom_call.1} parent=5 // pred_fallthru
        _
      %p131 = scmp.lt.s32.totalorder %s12, 2
      // Predicated region
      $region13: #{tpu_custom_call.1} parent=5 // pred_check
        %p132 = pneg %p131
      $region14: #{tpu_custom_call.1} parent=5 // pred_check_branch
        %134 = sbr.rel (%p132) target = $region16
      $region15: #{tpu_custom_call.1} parent=5 // pred_region
        // Predicated region
        $region17: #{tpu_custom_call.1} parent=15 // pred_check
          %p135 = pneg %p32
        $region18: #{tpu_custom_call.1} parent=15 // pred_check_branch
          %137 = sbr.rel (%p135) target = $region20
        $region19: #{tpu_custom_call.1} parent=15 // pred_region
          %p138 = scmp.lt.s32.totalorder %s12, 1
          %s139 = scalar_select %p138, %s12, 1
          %s140 = smul.addr %s139, 8
          %s141 = scalar_lea.vmem %s0, %s140
        $region20: #{tpu_custom_call.1} parent=15 // pred_fallthru
          _
        // Predicated region
        $region21: #{tpu_custom_call.1} parent=15 // pred_check
          %p142 = pneg %p58
        $region22: #{tpu_custom_call.1} parent=15 // pred_check_branch
          %144 = sbr.rel (%p142) target = $region24
        $region23: #{tpu_custom_call.1} parent=15 // pred_region
          %s145 = sand.u32 %s48, 1
          %s146 = scalar_lea.sflag [#allocation3], %s145
          %s147 = sand.u32 %s48, 1
          %s148 = smul.addr %s147, 8
          %s149 = scalar_lea.vmem [#allocation2], %s148
          %s151 = ssub.s32 128, 128
          %152 = vsyncadd %s146, %s151
          %s153 = smul.addr %s12, 128
          %s154 = scalar_lea.hbm %s1, %s153
          %s156 = sshll.u32 %s149, 4
          %s157 = int_to_ptr.vmem [resolvable:$true] %s156
          %159 = dma.hbm_to_vmem [thread:$0]  %s154, 128, %s157, %s146
        $region24: #{tpu_custom_call.1} parent=15 // pred_fallthru
          _
        // Predicated region
        $region25: #{tpu_custom_call.1} parent=15 // pred_check
          %p160 = pneg %p84
        $region26: #{tpu_custom_call.1} parent=15 // pred_check_branch
          %162 = sbr.rel (%p160) target = $region28
        $region27: #{tpu_custom_call.1} parent=15 // pred_region
          %p163 = scmp.lt.s32.totalorder %s12, 1
          %s164 = scalar_select %p163, %s12, 1
          %s165 = smul.addr %s164, 8
          %s166 = scalar_lea.vmem %s2, %s165
        $region28: #{tpu_custom_call.1} parent=15 // pred_fallthru
          _
      $region16: #{tpu_custom_call.1} parent=5 // pred_fallthru
        _
      %p167 = scmp.le.s32.totalorder 1, %s12
      %p168 = scmp.lt.s32.totalorder %s12, 3
      %p169 = pnand %p167, %p168
      %p170 = pneg %p169
      // Predicated region
      $region29: #{tpu_custom_call.1} parent=5 // pred_check
        _
      $region30: #{tpu_custom_call.1} parent=5 // pred_check_branch
        %172 = sbr.rel (%p169) target = $region32
      $region31: #{tpu_custom_call.1} parent=5 // pred_region
        %s173 = ssub.s32 %s12, 1
        %s174 = sand.u32 %s51, 1
        %s175 = scalar_lea.sflag [#allocation3], %s174
        %s176 = sand.u32 %s51, 1
        %s177 = smul.addr %s176, 8
        %s178 = scalar_lea.vmem [#allocation2], %s177
        // Predicated region
        $region33: #{tpu_custom_call.1} parent=31 // pred_check
          %p179 = pneg %p64
        $region34: #{tpu_custom_call.1} parent=31 // pred_check_branch
          %181 = sbr.rel (%p179) target = $region36
        $region35: #{tpu_custom_call.1} parent=31 // pred_region
          %182 = dma.done %s175, 128
        $region36: #{tpu_custom_call.1} parent=31 // pred_fallthru
          _
        %p183 = scmp.lt.s32.totalorder %s17, 1
        %s184 = scalar_select %p183, %s17, 1
        %s185 = smul.addr %s184, 8
        %s186 = scalar_lea.vmem %s0, %s185
        %p187 = pneg %p38
        %p188 = pneg %p35
        %s189 = sand.u32 %s51, 1
        %s190 = scalar_lea.sflag [#allocation3], %s189
        %s191 = sand.u32 %s51, 1
        %s192 = smul.addr %s191, 8
        %s193 = scalar_lea.vmem [#allocation2], %s192
        %p194 = pneg %p64
        %p195 = pneg %p61
        %p196 = scmp.lt.s32.totalorder %s17, 1
        %s197 = scalar_select %p196, %s17, 1
        %s198 = smul.addr %s197, 8
        %s199 = scalar_lea.vmem %s2, %s198
        %p200 = pneg %p90
        %p201 = pneg %p87
        %p202 = pneg %p116
        %p203 = pneg %p113
        %p204 = scmp.lt.s32.totalorder %s17, 1
        %s205 = scalar_select %p204, %s17, 1
        %s206 = scalar_lea.vmem %s3, %s205
        %p207 = scmp.lt.s32.totalorder %s17, 1
        %s208 = scalar_select %p207, %s17, 1
        %s209 = smul.addr %s208, 8
        %s210 = scalar_lea.vmem %s0, %s209
        %p211 = scmp.lt.s32.totalorder %s17, 1
        %s212 = scalar_select %p211, %s17, 1
        %s213 = smul.addr %s212, 8
        %s214 = scalar_lea.vmem %s2, %s213
        %p215 = scmp.lt.s32.totalorder %s17, 1
        %s216 = scalar_select %p215, %s17, 1
        %s217 = scalar_lea.vmem %s3, %s216
        %v218 = vld [vmem:[%s210] sm:$0xff]
        %v219 = vld [vmem:[%s178] sm:$0xff]
        %v220 = vsub.f32 %v218, %v219
        %v221 = vadd.f32 %v220, 1e-06
        %v222 = vmul.f32 %v221, %v221
        %vm223 = vcmask 261120
        %v224 = vsel %vm223, %v222, 0.0
        %225 = vadd.xlane.f32.xlu0 %v224
        %v226 = vpop.xlane.xlu0 %225
        %v227 = vld [vmem:[%s214] sm:$0xff]
        %v228 = vadd.f32 %v226, 1e-09
        %v229 = vrsqrt.pop %v228
        %v230 = vmul.f32 %v228, %v229
        %vm231 = vcmp.eq.f32.partialorder %v228, inf
        %v232 = vsel %vm231, %v228, %v230
        %vm233 = vcmp.eq.f32.partialorder %v228, 0.0
        %v234 = vand.u32 %v228, 2147483648
        %v235 = vsel %vm233, %v234, %v232
        %v236 = vsub.f32 1.0, %v235
        %v237 = vmax.f32 %v236, 0.0
        %v238 = vmul.f32 %v227, %v226
        %v239 = vsub.f32 1.0, %v227
        %v240 = vmul.f32 %v239, %v237
        %v241 = vmul.f32 %v240, %v237
        %v242 = vadd.f32 %v238, %v241
        %v243 = vmul.f32 %v242, 0.5
        %p244 = scmp.eq.s32.totalorder %s17, 1
        %p245 = scmp.ne.s32.totalorder %s17, 1
        // Predicated region
        $region37: #{tpu_custom_call.1} parent=31 // pred_check
          %p246 = pneg %p245
        $region38: #{tpu_custom_call.1} parent=31 // pred_check_branch
          %248 = sbr.rel (%p246) target = $region40
        $region39: #{tpu_custom_call.1} parent=31 // pred_region
          %vm249 = vcmask 7168
          %v250 = vsel %vm249, %v243, 0.0
          %251 = vadd.xlane.f32.xlu0 %v250
          %v252 = vpop.xlane.xlu0 %251
          %v253 = vrot.slane %v252, 4
          %v254 = vadd.f32 %v252, %v253
          %v255 = vrot.slane %v254, 2
          %v256 = vadd.f32 %v254, %v255
          %v257 = vrot.slane %v256, 1
          %v258 = vadd.f32 %v256, %v257
          %s259 = vtos %v258
          %v260 = vstv %s259
          %vm261 = vcmask 0
          %262 = vst.msk [vmem:[%s217] sm:$0x1] %vm261, %v260
        $region40: #{tpu_custom_call.1} parent=31 // pred_fallthru
          _
        // Predicated region
        $region41: #{tpu_custom_call.1} parent=31 // pred_check
          %p263 = pneg %p244
        $region42: #{tpu_custom_call.1} parent=31 // pred_check_branch
          %265 = sbr.rel (%p263) target = $region44
        $region43: #{tpu_custom_call.1} parent=31 // pred_region
          %v266 = vlaneseq
          %v267 = vshrl.u32 %v266, 7
          %vm268 = vcmp.lt.s32.totalorder %v267, 2
          %v269 = vsel %vm268, %v243, 0.0
          %vm270 = vcmask 7168
          %v271 = vsel %vm270, %v269, 0.0
          %272 = vadd.xlane.f32.xlu0 %v271
          %v273 = vpop.xlane.xlu0 %272
          %v274 = vrot.slane %v273, 4
          %v275 = vadd.f32 %v273, %v274
          %v276 = vrot.slane %v275, 2
          %v277 = vadd.f32 %v275, %v276
          %v278 = vrot.slane %v277, 1
          %v279 = vadd.f32 %v277, %v278
          %s280 = vtos %v279
          %v281 = vstv %s280
          %vm282 = vcmask 0
          %283 = vst.msk [vmem:[%s217] sm:$0x1] %vm282, %v281
        $region44: #{tpu_custom_call.1} parent=31 // pred_fallthru
          _
        %p284 = scmp.lt.s32.totalorder %s17, 1
        %s285 = scalar_select %p284, %s17, 1
        %s286 = scalar_lea.vmem %s3, %s285
        // Predicated region
        $region45: #{tpu_custom_call.1} parent=31 // pred_check
          %p287 = pneg %p113
        $region46: #{tpu_custom_call.1} parent=31 // pred_check_branch
          %289 = sbr.rel (%p287) target = $region48
        $region47: #{tpu_custom_call.1} parent=31 // pred_region
          _
        $region48: #{tpu_custom_call.1} parent=31 // pred_fallthru
          _
      $region32: #{tpu_custom_call.1} parent=5 // pred_fallthru
        _
      %p290 = scmp.le.s32.totalorder 2, %s12
      // Predicated region
      $region49: #{tpu_custom_call.1} parent=5 // pred_check
        %p291 = pneg %p290
      $region50: #{tpu_custom_call.1} parent=5 // pred_check_branch
        %293 = sbr.rel (%p291) target = $region52
      $region51: #{tpu_custom_call.1} parent=5 // pred_region
        %s294 = ssub.s32 %s12, 2
        // Predicated region
        $region53: #{tpu_custom_call.1} parent=51 // pred_check
          %p295 = pneg %p119
        $region54: #{tpu_custom_call.1} parent=51 // pred_check_branch
          %297 = sbr.rel (%p295) target = $region56
        $region55: #{tpu_custom_call.1} parent=51 // pred_region
          %p298 = scmp.lt.s32.totalorder %s18, 1
          %s299 = scalar_select %p298, %s18, 1
          %s300 = scalar_lea.vmem %s3, %s299
        $region56: #{tpu_custom_call.1} parent=51 // pred_fallthru
          _
      $region52: #{tpu_custom_call.1} parent=5 // pred_fallthru
        _
    $region6: #{tpu_custom_call.1} parent=1 // loop_footer
      %s16 = sadd.s32 1, %s12
    $region7: #{tpu_custom_call.1} parent=1 // loop_footer_branch
      %11 = sbr.rel target = $region3
    $region8: #{tpu_custom_call.1} parent=1 // loop_exit
      _
    %301 = vsyncpa [#allocation3], 1
    %s302 = scalar_lea.sflag [#allocation3], 1
    %303 = vsyncpa %s302, 1

</llo_original>
